<compile_context>
chip_gen: v7x
topology: tpu7x:2x2x1
jax: 0.10.0
libtpu: 0.0.40
codegen_flags: <defaults>
</compile_context>

<pallas_src>
import functools

import jax
import jax.numpy as jnp
from jax import lax
from jax.experimental import pallas as pl
from jax.experimental.pallas import tpu as pltpu

_LANES = 128
_TARGET_BLOCK_BYTES = 4 << 20     # ~4 MiB per f32 input block per pipeline buffer
_MAX_RAGGED_LAST = 32768          # widest non-128-multiple last dim handled without padding


def _num_tensorcores() -> int:
    """TensorCores visible to one Pallas kernel (megacore / v7x => 2, else 1)."""
    try:
        kind = jax.devices()[0].device_kind.lower()
    except Exception:
        return 1
    if any(s in kind for s in ("lite", "v5e", "v6e", "v2", "v3")):
        return 1
    if any(s in kind for s in ("v4", "v5p", "v5 p", "v7", "7x")):
        return 2
    return 1


def _bce_partial_sum_kernel(x_ref, y_ref, o_ref, *, tile_rows, tiles_per_core,
                            valid_rows, acc_rows, grid_exact):
    """Accumulates per-core partial sums of stable BCE-with-logits terms."""
    i = pl.program_id(1)  # tile index within this core's slice (reduction axis)

    @pl.when(i == 0)
    def _init():
        o_ref[...] = jnp.zeros_like(o_ref)

    # Cast on load; f32 math even for narrow inputs (v5e has no bf16 VPU/EUP).
    x = x_ref[...].astype(jnp.float32)
    y = y_ref[...].astype(jnp.float32)          # mirrors label.float()
    per_elem = jnp.maximum(x, 0.0) - x * y + jnp.log1p(jnp.exp(-jnp.abs(x)))

    def fold(v):
        # Pure-VPU fold of the tile into the small resident accumulator.
        if acc_rows == 1:
            return v.sum(axis=0, keepdims=True)
        return v.reshape(tile_rows // 8, 8, v.shape[-1]).sum(axis=0)

    if grid_exact:
        # Grid tiles cover the array exactly: no masking code is generated.
        o_ref[...] += fold(per_elem)
    else:
        # Row-count threshold (rows, not absolute element index) => no int32
        # overflow for any HBM-sized array.  Only the tile that contains the
        # ragged tail (or a fully out-of-range clamped tile) pays for masking.
        base_row = (pl.program_id(0) * tiles_per_core + i) * tile_rows
        limit = valid_rows - base_row

        @pl.when(limit >= tile_rows)
        def _full_tile():
            o_ref[...] += fold(per_elem)

        @pl.when(limit < tile_rows)
        def _tail_tile():
            row = lax.broadcasted_iota(jnp.int32, per_elem.shape, 0)
            o_ref[...] += fold(jnp.where(row < limit, per_elem, 0.0))


def _canonicalize_2d(output, label):
    """Reshape inputs to a lane-friendly 2-D slab with a free bitcast reshape.

    Pads only in a rare fallback (odd 1-D totals / huge ragged last dims); the
    pad values (logits=-1000, label=0) make the BCE term exactly zero so no
    element-level masking is ever required for padded entries."""
    total = int(output.size)
    if total % _LANES == 0:
        rows = total // _LANES
        return output.reshape(rows, _LANES), label.reshape(rows, _LANES)
    if output.ndim >= 2 and int(output.shape[-1]) <= _MAX_RAGGED_LAST:
        last = int(output.shape[-1])
        rows = total // last
        return output.reshape(rows, last), label.reshape(rows, last)
    # Rare fallback: one extra HBM pass to pad the flat tail to a lane multiple.
    rows = -(-total // _LANES)
    pad = rows * _LANES - total
    out_f = jnp.pad(output.reshape(-1), (0, pad), constant_values=-1000)
    lab_f = jnp.pad(label.reshape(-1), (0, pad), constant_values=0)
    return out_f.reshape(rows, _LANES), lab_f.reshape(rows, _LANES)


def calculate_loss(output: jax.Array, label: jax.Array) -> jax.Array:
    """Pallas equivalent of ModelWrapper.calculate_loss with a
    BCEWithLogitsLoss criterion (mean reduction). Returns a scalar."""
    assert output.shape == label.shape
    total = int(output.size)
    assert total > 0

    x2d, y2d = _canonicalize_2d(output, label)
    rows, cols = int(x2d.shape[0]), int(x2d.shape[1])
    cols_pad = -(-cols // _LANES) * _LANES

    # Tile sizing: biggest row-tile that keeps one f32 block around 4 MiB.
    bytes_per_row = cols_pad * 4
    max_tile_rows = max(8, (_TARGET_BLOCK_BYTES // bytes_per_row) // 8 * 8)
    if rows >= 8:
        tile_rows = min(max_tile_rows, (rows // 8) * 8)   # multiple of 8, <= rows
    else:
        tile_rows = rows                                  # single full-array block
    num_row_blocks = -(-rows // tile_rows)

    # Second TensorCore only where one exists and there is work to split.
    num_cores = 2 if (_num_tensorcores() >= 2 and cols == _LANES
                      and num_row_blocks >= 2) else 1
    tiles_per_core = -(-num_row_blocks // num_cores)
    grid_exact = (num_cores * tiles_per_core * tile_rows == rows)

    acc_rows = 8 if (cols == _LANES and tile_rows % 8 == 0) else 1
    last_block = num_row_blocks - 1

    def row_block_map(c, i):
        # Clamp so a fully-out-of-range tile (odd tile count split across two
        # cores) re-reads the last valid block; its contribution is masked to 0.
        return (jnp.minimum(c * tiles_per_core + i, last_block), 0)

    kernel = functools.partial(
        _bce_partial_sum_kernel,
        tile_rows=tile_rows,
        tiles_per_core=tiles_per_core,
        valid_rows=rows,
        acc_rows=acc_rows,
        grid_exact=grid_exact,
    )

    # Explicit VMEM budget: 2 inputs x 2 pipeline buffers + resident output,
    # with headroom.  Stays well under v7x's 64 MiB physical VMEM.
    in_bytes = 2 * tile_rows * cols_pad * (x2d.dtype.itemsize + y2d.dtype.itemsize)
    out_bytes = 2 * acc_rows * cols_pad * 4
    vmem_limit = int(min(max(in_bytes + out_bytes + (4 << 20), 32 << 20), 48 << 20))

    bytes_accessed = (rows * cols * (x2d.dtype.itemsize + y2d.dtype.itemsize)
                      + num_cores * acc_rows * cols * 4)

    partials = pl.pallas_call(
        kernel,
        out_shape=jax.ShapeDtypeStruct((num_cores * acc_rows, cols), jnp.float32),
        grid=(num_cores, tiles_per_core),
        in_specs=[
            pl.BlockSpec((tile_rows, cols), row_block_map),
            pl.BlockSpec((tile_rows, cols), row_block_map),
        ],
        out_specs=pl.BlockSpec((acc_rows, cols), lambda c, i: (c, 0)),
        compiler_params=pltpu.CompilerParams(
            dimension_semantics=("parallel", "arbitrary"),
            vmem_limit_bytes=vmem_limit),
        cost_estimate=pl.CostEstimate(
            flops=5 * total,
            transcendentals=2 * total,
            bytes_accessed=bytes_accessed),
    )(x2d, y2d)

    # Single tiny cross-lane/sublane reduce + cross-core combine, once, in XLA.
    return jnp.sum(partials) * (1.0 / total)


def _reference_loss(output, label):
    x = output.astype(jnp.float32)
    y = label.astype(jnp.float32)
    per = jnp.maximum(x, 0.0) - x * y + jnp.log1p(jnp.exp(-jnp.abs(x)))
    return jnp.mean(per)


if __name__ == "__main__":
    key = jax.random.PRNGKey(0)
    k1, k2, k3, k4, k5, k6 = jax.random.split(key, 6)

    # batch['output']: logits for 8 samples x 128 variables;
    # batch['label'] : binary labels (int -> .float() inside the wrapper).
    output = jax.random.normal(k1, (8, 128), dtype=jnp.float32)
    label = jax.random.bernoulli(k2, 0.5, (8, 128)).astype(jnp.int32)
    batch = {"output": output, "label": label}
    loss = jax.block_until_ready(calculate_loss(batch["output"], batch["label"]))
    ref = _reference_loss(output, label)
    assert jnp.allclose(loss, ref, rtol=1e-5, atol=1e-5), (loss, ref)

    # Ragged (non lane-aligned) batch: exercises the no-pad full-array-block path.
    output2 = jax.random.normal(k3, (7, 100), dtype=jnp.float32)
    label2 = jax.random.bernoulli(k4, 0.5, (7, 100)).astype(jnp.int32)
    loss2 = jax.block_until_ready(calculate_loss(output2, label2))
    ref2 = _reference_loss(output2, label2)
    assert jnp.allclose(loss2, ref2, rtol=1e-5, atol=1e-5), (loss2, ref2)

    # Lane-aligned but tile-ragged batch: exercises multi-tile + masked tail tile.
    output3 = jax.random.normal(k5, (50, 128), dtype=jnp.float32)
    label3 = jax.random.bernoulli(k6, 0.5, (50, 128)).astype(jnp.int32)
    loss3 = jax.block_until_ready(calculate_loss(output3, label3))
    ref3 = _reference_loss(output3, label3)
    assert jnp.allclose(loss3, ref3, rtol=1e-5, atol=1e-5), (loss3, ref3)

    print("KERNEL_OK")
</pallas_src>

<mosaic_0001>
module attributes {stable_mosaic.version = 11 : i64} {
  func.func @_bce_partial_sum_kernel(%arg0: i32, %arg1: i32, %arg2: memref<8x128xf32, #tpu.memory_space<vmem>>, %arg3: memref<8x128xi32, #tpu.memory_space<vmem>>, %arg4: memref<8x128xf32, #tpu.memory_space<vmem>>) attributes {dimension_semantics = [#tpu.dimension_semantics<parallel>, #tpu.dimension_semantics<arbitrary>], iteration_bounds = array<i64: 1, 1>, scalar_prefetch = 0 : i64, scratch_operands = 0 : i64, tpu.core_type = #tpu.core_type<tc>, window_params = [{transform_indices = @transform_0, window_bounds = array<i64: 8, 128>}, {transform_indices = @transform_1, window_bounds = array<i64: 8, 128>}, {transform_indices = @transform_2, window_bounds = array<i64: 8, 128>}]} {
    %c0_i32 = arith.constant 0 : i32
    %0 = arith.cmpi eq, %arg1, %c0_i32 : i32
    %1 = arith.extui %0 : i1 to i32
    %c0_i32_0 = arith.constant 0 : i32
    %2 = arith.cmpi ne, %1, %c0_i32_0 : i32
    scf.if %2 {
      %cst_10 = arith.constant 0.000000e+00 : f32
      %21 = vector.broadcast %cst_10 : f32 to vector<8x128xf32>
      %c0_11 = arith.constant 0 : index
      %c0_12 = arith.constant 0 : index
      %22 = vector.load %arg4[%c0_11, %c0_12] : memref<8x128xf32, #tpu.memory_space<vmem>>, vector<8x128xf32>
      tpu.vector_store %arg4[%c0_11, %c0_12], %21 {strides = array<i32>} : memref<8x128xf32, #tpu.memory_space<vmem>>, vector<8x128xf32>,
    } else {
    }
    %c0 = arith.constant 0 : index
    %c0_1 = arith.constant 0 : index
    %3 = vector.load %arg2[%c0, %c0_1] : memref<8x128xf32, #tpu.memory_space<vmem>>, vector<8x128xf32>
    %c0_2 = arith.constant 0 : index
    %c0_3 = arith.constant 0 : index
    %4 = vector.load %arg3[%c0_2, %c0_3] : memref<8x128xi32, #tpu.memory_space<vmem>>, vector<8x128xi32>
    %5 = arith.sitofp %4 : vector<8x128xi32> to vector<8x128xf32>
    %cst = arith.constant 0.000000e+00 : f32
    %6 = vector.broadcast %cst : f32 to vector<8x128xf32>
    %7 = arith.maximumf %3, %6 : vector<8x128xf32>
    %8 = arith.mulf %3, %5 : vector<8x128xf32>
    %9 = arith.subf %7, %8 : vector<8x128xf32>
    %10 = math.absf %3 : vector<8x128xf32>
    %cst_4 = arith.constant 0.000000e+00 : f32
    %11 = vector.broadcast %cst_4 : f32 to vector<8x128xf32>
    %12 = arith.subf %11, %10 : vector<8x128xf32>
    %13 = math.exp %12 : vector<8x128xf32>
    %14 = math.log1p %13 : vector<8x128xf32>
    %15 = arith.addf %9, %14 : vector<8x128xf32>
    %c0_5 = arith.constant 0 : index
    %c0_6 = arith.constant 0 : index
    %16 = vector.load %arg4[%c0_5, %c0_6] : memref<8x128xf32, #tpu.memory_space<vmem>>, vector<8x128xf32>
    %17 = vector.shape_cast %15 : vector<8x128xf32> to vector<1x8x128xf32>
    %cst_7 = arith.constant dense<0.000000e+00> : vector<8x128xf32>
    %18 = vector.multi_reduction <add>, %17, %cst_7 [0] : vector<1x8x128xf32> to vector<8x128xf32>
    %19 = arith.addf %16, %18 : vector<8x128xf32>
    %c0_8 = arith.constant 0 : index
    %c0_9 = arith.constant 0 : index
    %20 = vector.load %arg4[%c0_8, %c0_9] : memref<8x128xf32, #tpu.memory_space<vmem>>, vector<8x128xf32>
    tpu.vector_store %arg4[%c0_8, %c0_9], %19 {strides = array<i32>} : memref<8x128xf32, #tpu.memory_space<vmem>>, vector<8x128xf32>,
    return
  }
  func.func @transform_0(%arg0: i32, %arg1: i32) -> (i32, i32) {
    %c1_i32 = arith.constant 1 : i32
    %0 = arith.muli %arg0, %c1_i32 : i32
    %1 = arith.addi %0, %arg1 : i32
    %c0_i32 = arith.constant 0 : i32
    %2 = arith.minsi %1, %c0_i32 : i32
    %c0_i32_0 = arith.constant 0 : i32
    %c0_i32_1 = arith.constant 0 : i32
    return %2, %c0_i32_0 : i32, i32
  }
  func.func @transform_1(%arg0: i32, %arg1: i32) -> (i32, i32) {
    %c1_i32 = arith.constant 1 : i32
    %0 = arith.muli %arg0, %c1_i32 : i32
    %1 = arith.addi %0, %arg1 : i32
    %c0_i32 = arith.constant 0 : i32
    %2 = arith.minsi %1, %c0_i32 : i32
    %c0_i32_0 = arith.constant 0 : i32
    %c0_i32_1 = arith.constant 0 : i32
    return %2, %c0_i32_0 : i32, i32
  }
  func.func @transform_2(%arg0: i32, %arg1: i32) -> (i32, i32) {
    %c0_i32 = arith.constant 0 : i32
    %c0_i32_0 = arith.constant 0 : i32
    return %arg0, %c0_i32 : i32, i32
  }
}

</mosaic_0001>

<llo_original>
// kernel: tpu_custom_call.1
$region0: #{tpu_custom_call.1}
  #allocation0 [shape = 'u32[]', space=smem, size = 0x4, offset = 0x4, fixed_abs, tag = 'smem constant byte address 0x4 - core index']
  #allocation1 [shape = 'u32[144,128]{1,0:T(1,128)}', space=vmem, size = 0x12000, scoped, tag = 'internal scratch']
  %s0 = inlined_call_operand.hbm [shape: f32[8,128], index: 0, kind: input, shape index: {}]
  %s1 = inlined_call_operand.hbm [shape: s32[8,128], index: 1, kind: input, shape index: {}]
  %s2 = inlined_call_operand.hbm [shape: f32[8,128], index: 2, kind: output, shape index: {}]
  %s3 = sld [smem:[#allocation0]]
  $region30: #{tpu_custom_call.1} parent=0
    _
  %s5 = ssub.s32 1, %s3
  %s6 = scalar_select 0, %s5, %s3
  $region1: #{tpu_custom_call.1} parent=0
    #allocation2 [shape = 'u8[4096]{0}', space=vmem, size = 0x1000, scoped, tag = 'input window, operand 0, single buffered']
    #allocation3 [shape = 's32[1]{0}', space=sflag, size = 0x4, scoped, tag = 'scoped memory for tpu_custom_call.1']
    #allocation4 [shape = 's32[1]{0}', space=sflag, size = 0x4, scoped, tag = 'scoped memory for tpu_custom_call.1']
    #allocation5 [shape = 'u8[4096]{0}', space=vmem, size = 0x1000, scoped, tag = 'input window, operand 1, single buffered']
    #allocation6 [shape = 's32[1]{0}', space=sflag, size = 0x4, scoped, tag = 'scoped memory for tpu_custom_call.1']
    #allocation7 [shape = 'u8[4096]{0}', space=vmem, size = 0x1000, scoped, tag = 'output window, operand 0, single buffered']
    %7 = vsyncpa [#allocation3], 0
    %8 = vsyncpa [#allocation6], 0
    %9 = vsyncpa [#allocation4], 0
    // Predicated region
    $region2: #{tpu_custom_call.1} parent=1 // pred_check
      _
    $region3: #{tpu_custom_call.1} parent=1 // pred_check_branch
      %11 = sbr.rel (0) target = $region5
    $region4: #{tpu_custom_call.1} parent=1 // pred_region
      %s12 = sadd.s32 0, 0
      %p13 = scmp.lt.s32.totalorder %s12, 0
      %s14 = scalar_select %p13, %s12, 0
      %s16 = ssub.s32 128, 128
      %17 = vsyncadd [#allocation3], %s16
      %s18 = smul.addr %s14, 128
      %s19 = scalar_lea.hbm %s0, %s18
      %s21 = sshll.u32 [#allocation2], 4
      %s22 = int_to_ptr.vmem [resolvable:$true] %s21
      %24 = dma.hbm_to_vmem [thread:$0]  %s19, 128, %s22, [#allocation3]
    $region5: #{tpu_custom_call.1} parent=1 // pred_fallthru
      _
    // Predicated region
    $region6: #{tpu_custom_call.1} parent=1 // pred_check
      _
    $region7: #{tpu_custom_call.1} parent=1 // pred_check_branch
      %26 = sbr.rel (0) target = $region9
    $region8: #{tpu_custom_call.1} parent=1 // pred_region
      %s27 = sadd.s32 0, 0
      %p28 = scmp.lt.s32.totalorder %s27, 0
      %s29 = scalar_select %p28, %s27, 0
      %s31 = ssub.s32 128, 128
      %32 = vsyncadd [#allocation6], %s31
      %s33 = smul.addr %s29, 128
      %s34 = scalar_lea.hbm %s1, %s33
      %s36 = sshll.u32 [#allocation5], 4
      %s37 = int_to_ptr.vmem [resolvable:$true] %s36
      %39 = dma.hbm_to_vmem [thread:$0]  %s34, 128, %s37, [#allocation6]
    $region9: #{tpu_custom_call.1} parent=1 // pred_fallthru
      _
    // Predicated region
    $region10: #{tpu_custom_call.1} parent=1 // pred_check
      _
    $region11: #{tpu_custom_call.1} parent=1 // pred_check_branch
      %41 = sbr.rel (0) target = $region13
    $region12: #{tpu_custom_call.1} parent=1 // pred_region
      %42 = dma.done [#allocation3], 128
    $region13: #{tpu_custom_call.1} parent=1 // pred_fallthru
      _
    // Predicated region
    $region14: #{tpu_custom_call.1} parent=1 // pred_check
      _
    $region15: #{tpu_custom_call.1} parent=1 // pred_check_branch
      %44 = sbr.rel (0) target = $region17
    $region16: #{tpu_custom_call.1} parent=1 // pred_region
      %45 = dma.done [#allocation6], 128
    $region17: #{tpu_custom_call.1} parent=1 // pred_fallthru
      _
    %s46 = sadd.s32 0, 0
    %p47 = scmp.lt.s32.totalorder %s46, 0
    %s48 = scalar_select %p47, %s46, 0
    %s49 = sadd.s32 0, 0
    %p50 = scmp.lt.s32.totalorder %s49, 0
    %s51 = scalar_select %p50, %s49, 0
    %p52 = scmp.eq.s32.totalorder 0, 0
    // Predicated region
    $region18: #{tpu_custom_call.1} parent=1 // pred_check
      %p53 = pneg %p52
    $region19: #{tpu_custom_call.1} parent=1 // pred_check_branch
      %55 = sbr.rel (%p53) target = $region21
    $region20: #{tpu_custom_call.1} parent=1 // pred_region
      %56 = vst [vmem:[#allocation7] sm:$0xff] 0.0
    $region21: #{tpu_custom_call.1} parent=1 // pred_fallthru
      _
    %v57 = vld [vmem:[#allocation2] sm:$0xff]
    %v58 = vld [vmem:[#allocation5] sm:$0xff]
    %v59 = vcvt.s32.f32 %v58
    %v60 = vmax.f32 %v57, 0.0
    %v61 = vmul.f32 %v57, %v59
    %v62 = vsub.f32 %v60, %v61
    %v63 = vand.u32 2147483647, %v57
    %v64 = vsub.f32 0.0, %v63
    %v65 = vmul.f32 %v64, 1.442695
    %v66 = vpow.pop %v65
    %v67 = vadd.f32 %v66, 1.0
    %v68 = vlog2.pop %v67
    %v69 = vmul.f32 %v68, 0.6931472
    %v70 = vmul.f32 -0.5, %v66
    %v71 = vadd.f32 %v70, 1.0
    %v72 = vmul.f32 %v71, %v66
    %v73 = vand.u32 2147483647, %v66
    %vm74 = vcmp.lt.f32.partialorder %v73, 0.0004427343
    %v75 = vsel %vm74, %v72, %v69
    %v76 = vadd.f32 %v62, %v75
    %v77 = vld [vmem:[#allocation7] sm:$0xff]
    %v78 = vadd.f32 %v76, 0.0
    %v79 = vadd.f32 %v77, %v78
    %80 = vst [vmem:[#allocation7] sm:$0xff] %v79
    // Predicated region
    $region22: #{tpu_custom_call.1} parent=1 // pred_check
      _
    $region23: #{tpu_custom_call.1} parent=1 // pred_check_branch
      %82 = sbr.rel (0) target = $region25
    $region24: #{tpu_custom_call.1} parent=1 // pred_region
      %s84 = ssub.s32 128, 128
      %85 = vsyncadd [#allocation4], %s84
      %s87 = sshll.u32 [#allocation7], 4
      %s88 = int_to_ptr.vmem [resolvable:$true] %s87
      %90 = dma.vmem_to_hbm [thread:$0]  %s88, 128, %s2, [#allocation4]
    $region25: #{tpu_custom_call.1} parent=1 // pred_fallthru
      _
    // Predicated region
    $region26: #{tpu_custom_call.1} parent=1 // pred_check
      _
    $region27: #{tpu_custom_call.1} parent=1 // pred_check_branch
      %92 = sbr.rel (0) target = $region29
    $region28: #{tpu_custom_call.1} parent=1 // pred_region
      %93 = dma.done [#allocation4], 128
    $region29: #{tpu_custom_call.1} parent=1 // pred_fallthru
      _
    %94 = vsyncpa [#allocation3], 1
    %95 = vsyncpa [#allocation6], 1
    %96 = vsyncpa [#allocation4], 1

</llo_original>
